<compile_context>
chip_gen: v7x
topology: tpu7x:2x2x1
jax: 0.10.0
libtpu: 0.0.40
codegen_flags: <defaults>
</compile_context>

<pallas_src>
import jax
import jax.numpy as jnp
from jax import lax
from jax.experimental import pallas as pl
from jax.experimental.pallas import tpu as pltpu

# ---------------- small config (consistent with the module, scaled down) ----
HIDDEN = 32
N_HEADS = 4
N_KV_HEADS = 2
HEAD_DIM = HIDDEN // N_HEADS          # 8
N_REP = N_HEADS // N_KV_HEADS         # 2
SCALING = HEAD_DIM ** -0.5
ROPE_THETA = 1.0e6
B, S = 2, 8
NEG_INF = -1e9

MXU_DTYPE = jnp.bfloat16              # MXU operands; elementwise/softmax stay f32


# ---------------- fused Pallas kernel (one grid step per batch row) ---------
def _make_attention_kernel(with_aw):
    def kernel(x_ref, wqkv_ref, wo_ref, cos_ref, sin_ref, out_ref, *rest):
        # x_ref:    (1, S, HIDDEN+1)   activations with a trailing ones column
        # wqkv_ref: (HIDDEN+1, (NH+2*NKV)*D)  bf16, [Wq|Wk|Wv ; bq|bk|bv]
        # wo_ref:   (NH*D, HIDDEN)     bf16
        # cos_ref/sin_ref: (1, S, D)   rotary tables, shared by all heads
        # out_ref:  (1, S, HIDDEN)
        # aw_ref:   (1, NH, S, S)      (optional)
        if with_aw:
            aw_ref, ctx_ref = rest
        else:
            (ctx_ref,) = rest

        seq = cos_ref.shape[1]
        d = HEAD_DIM
        half = d // 2

        # ---- fused QKV projection: ONE MXU pass, biases folded via ones col ----
        x = x_ref[0].astype(MXU_DTYPE)                                  # (S, H+1)
        qkv = jnp.dot(x, wqkv_ref[...],
                      preferred_element_type=jnp.float32)               # (S, 64) f32

        # ---- stack per-query-head q/k/v; GQA: kv head = h // N_REP (no repeat) ----
        k_off = N_HEADS * d
        v_off = (N_HEADS + N_KV_HEADS) * d
        qh = jnp.stack([qkv[:, h * d:(h + 1) * d]
                        for h in range(N_HEADS)], axis=0)               # (NH, S, D)
        kh = jnp.stack([qkv[:, k_off + (h // N_REP) * d:
                               k_off + (h // N_REP + 1) * d]
                        for h in range(N_HEADS)], axis=0)               # (NH, S, D)
        vh = jnp.stack([qkv[:, v_off + (h // N_REP) * d:
                               v_off + (h // N_REP + 1) * d]
                        for h in range(N_HEADS)], axis=0)               # (NH, S, D)

        # ---- RoPE (f32 elementwise), batched over heads; tables loaded once ----
        cos = cos_ref[0][None, :, :]                                    # (1, S, D)
        sin = sin_ref[0][None, :, :]

        def rope(t):
            # rotate_half: swap the two head_dim halves with a sign flip.
            # TODO(synk): with a real, lane-aligned HEAD_DIM (>=128) use
            # pltpu.roll(t, HEAD_DIM // 2, axis=-1) with a sign-folded sin table;
            # at HEAD_DIM=8 the 4-lane half-swap is cheaper and always lowers.
            rot = jnp.concatenate([-t[..., half:], t[..., :half]], axis=-1)
            return t * cos + rot * sin

        qh = rope(qh) * SCALING     # fold 1/sqrt(d) into q (fewer elems than scores)
        kh = rope(kh)

        # ---- causal mask generated on-chip ----
        row = lax.broadcasted_iota(jnp.int32, (seq, seq), 0)
        col = lax.broadcasted_iota(jnp.int32, (seq, seq), 1)
        causal = jnp.where(col <= row, 0.0, NEG_INF).astype(jnp.float32)

        # ---- softmax attention: ONE batched MXU pass over all heads ----
        scores = jnp.einsum("hqd,hkd->hqk",
                            qh.astype(MXU_DTYPE), kh.astype(MXU_DTYPE),
                            preferred_element_type=jnp.float32)          # (NH,S,S)
        scores = scores + causal[None, :, :]
        m = jnp.max(scores, axis=-1, keepdims=True)
        p = jnp.exp(scores - m)
        denom = jnp.sum(p, axis=-1, keepdims=True)
        if with_aw:
            p = p / denom                       # exact: returned weights sum to 1
            aw_ref[...] = p[None]               # single whole-block store
        else:
            p = p * pl.reciprocal(denom, approx=True)     # EUP slot, ~free

        ctx = jnp.einsum("hqk,hkd->hqd",
                         p.astype(MXU_DTYPE), vh.astype(MXU_DTYPE),
                         preferred_element_type=jnp.float32)             # (NH,S,D)

        # ---- assemble (S, NH*D) context in a VMEM scratch slab (no concats) ----
        for h in range(N_HEADS):
            ctx_ref[:, h * d:(h + 1) * d] = ctx[h]

        # ---- output projection, single whole-block store ----
        out = jnp.dot(ctx_ref[...].astype(MXU_DTYPE), wo_ref[...],
                      preferred_element_type=jnp.float32)                # (S, HIDDEN)
        out_ref[...] = out[None].astype(out_ref.dtype)

    return kernel


# ---------------- glue ----------------
def attention_forward(hidden_states, params, cos, sin, *, return_attn_weights=True):
    b, s, hidden = hidden_states.shape
    assert hidden == HIDDEN
    dtype = hidden_states.dtype

    # Fold q/k/v biases into one fused QKV weight via an appended ones column.
    x_aug = jnp.concatenate(
        [hidden_states, jnp.ones((b, s, 1), dtype)], axis=-1)            # (B,S,H+1)
    w_qkv = jnp.concatenate([
        jnp.concatenate([params["q_w"], params["q_b"][None, :]], axis=0),
        jnp.concatenate([params["k_w"], params["k_b"][None, :]], axis=0),
        jnp.concatenate([params["v_w"], params["v_b"][None, :]], axis=0),
    ], axis=1).astype(MXU_DTYPE)                                          # (H+1, 64)
    w_o = params["o_w"].astype(MXU_DTYPE)                                 # (32, 32)

    qkv_out = (N_HEADS + 2 * N_KV_HEADS) * HEAD_DIM

    out_shape = [jax.ShapeDtypeStruct((b, s, HIDDEN), dtype)]
    out_specs = [pl.BlockSpec((1, s, HIDDEN), lambda i: (i, 0, 0))]
    if return_attn_weights:
        out_shape.append(jax.ShapeDtypeStruct((b, N_HEADS, s, s), jnp.float32))
        out_specs.append(pl.BlockSpec((1, N_HEADS, s, s), lambda i: (i, 0, 0, 0)))

    grid_spec = pltpu.PrefetchScalarGridSpec(
        num_scalar_prefetch=0,
        grid=(b,),                                  # one grid step per batch row
        in_specs=[
            pl.BlockSpec((1, s, HIDDEN + 1), lambda i: (i, 0, 0)),       # x_aug
            pl.BlockSpec((HIDDEN + 1, qkv_out), lambda i: (0, 0)),       # w_qkv
            pl.BlockSpec((N_HEADS * HEAD_DIM, HIDDEN), lambda i: (0, 0)),  # w_o
            pl.BlockSpec((1, s, HEAD_DIM), lambda i: (i, 0, 0)),         # cos
            pl.BlockSpec((1, s, HEAD_DIM), lambda i: (i, 0, 0)),         # sin
        ],
        out_specs=tuple(out_specs) if return_attn_weights else out_specs[0],
        scratch_shapes=[pltpu.VMEM((s, N_HEADS * HEAD_DIM), jnp.float32)],
    )

    result = pl.pallas_call(
        _make_attention_kernel(return_attn_weights),
        out_shape=tuple(out_shape) if return_attn_weights else out_shape[0],
        grid_spec=grid_spec,
        compiler_params=pltpu.CompilerParams(
            dimension_semantics=("parallel",)),     # batch rows -> both TCs on v7x
    )(x_aug, w_qkv, w_o, cos, sin)

    if return_attn_weights:
        out, attn_w = result
        return out, attn_w
    return result, None


# ---------------- pure-JAX reference (mirrors the PyTorch module) ----------
def _rotate_half(x):
    d = x.shape[-1]
    return jnp.concatenate([-x[..., d // 2:], x[..., : d // 2]], axis=-1)


def ref_attention(hidden_states, params, cos, sin):
    b, s, _ = hidden_states.shape
    q = hidden_states @ params["q_w"] + params["q_b"]
    k = hidden_states @ params["k_w"] + params["k_b"]
    v = hidden_states @ params["v_w"] + params["v_b"]
    q = q.reshape(b, s, N_HEADS, HEAD_DIM).transpose(0, 2, 1, 3)
    k = k.reshape(b, s, N_KV_HEADS, HEAD_DIM).transpose(0, 2, 1, 3)
    v = v.reshape(b, s, N_KV_HEADS, HEAD_DIM).transpose(0, 2, 1, 3)
    c = cos[:, None, :, :]
    sn = sin[:, None, :, :]
    q = q * c + _rotate_half(q) * sn
    k = k * c + _rotate_half(k) * sn
    k = jnp.repeat(k, N_REP, axis=1)
    v = jnp.repeat(v, N_REP, axis=1)
    i = jnp.arange(s)
    mask = jnp.where(i[None, :] <= i[:, None], 0.0, NEG_INF).astype(jnp.float32)
    scores = jnp.einsum("bhqd,bhkd->bhqk", q, k) * SCALING + mask
    probs = jax.nn.softmax(scores.astype(jnp.float32), axis=-1)
    attn = jnp.einsum("bhqk,bhkd->bhqd", probs, v)
    attn = attn.transpose(0, 2, 1, 3).reshape(b, s, N_HEADS * HEAD_DIM)
    return attn @ params["o_w"], probs


# ---------------- setup ----------------
def make_params(key):
    ks = jax.random.split(key, 7)
    std = 0.02
    return {
        "q_w": jax.random.normal(ks[0], (HIDDEN, N_HEADS * HEAD_DIM), jnp.float32) * std,
        "q_b": jax.random.normal(ks[1], (N_HEADS * HEAD_DIM,), jnp.float32) * std,
        "k_w": jax.random.normal(ks[2], (HIDDEN, N_KV_HEADS * HEAD_DIM), jnp.float32) * std,
        "k_b": jax.random.normal(ks[3], (N_KV_HEADS * HEAD_DIM,), jnp.float32) * std,
        "v_w": jax.random.normal(ks[4], (HIDDEN, N_KV_HEADS * HEAD_DIM), jnp.float32) * std,
        "v_b": jax.random.normal(ks[5], (N_KV_HEADS * HEAD_DIM,), jnp.float32) * std,
        "o_w": jax.random.normal(ks[6], (N_HEADS * HEAD_DIM, HIDDEN), jnp.float32) * std,
    }


def make_rope(b, s, d):
    inv_freq = 1.0 / (ROPE_THETA ** (jnp.arange(0, d, 2, dtype=jnp.float32) / d))
    pos = jnp.arange(s, dtype=jnp.float32)
    freqs = jnp.outer(pos, inv_freq)                   # (S, D/2)
    emb = jnp.concatenate([freqs, freqs], axis=-1)     # (S, D)
    cos = jnp.broadcast_to(jnp.cos(emb)[None], (b, s, d))
    sin = jnp.broadcast_to(jnp.sin(emb)[None], (b, s, d))
    return cos, sin


if __name__ == "__main__":
    key = jax.random.PRNGKey(0)
    pkey, xkey = jax.random.split(key)
    params = make_params(pkey)
    x = jax.random.normal(xkey, (B, S, HIDDEN), jnp.float32)
    cos, sin = make_rope(B, S, HEAD_DIM)

    out, attn_w = attention_forward(x, params, cos, sin, return_attn_weights=True)
    out = jax.block_until_ready(out)
    attn_w = jax.block_until_ready(attn_w)

    ref_out, ref_w = ref_attention(x, params, cos, sin)
    err_o = float(jnp.max(jnp.abs(out - ref_out)))
    err_w = float(jnp.max(jnp.abs(attn_w - ref_w)))
    if err_o > 1e-2 or err_w > 1e-2:
        raise AssertionError(f"mismatch vs reference: out={err_o}, weights={err_w}")

    print("KERNEL_OK")
</pallas_src>

<mosaic_0001>
module attributes {stable_mosaic.version = 11 : i64} {
  func.func @kernel(%arg0: i32, %arg1: memref<1x8x33xf32, #tpu.memory_space<vmem>>, %arg2: memref<33x64xbf16, #tpu.memory_space<vmem>>, %arg3: memref<32x32xbf16, #tpu.memory_space<vmem>>, %arg4: memref<1x8x8xf32, #tpu.memory_space<vmem>>, %arg5: memref<1x8x8xf32, #tpu.memory_space<vmem>>, %arg6: memref<1x8x32xf32, #tpu.memory_space<vmem>>, %arg7: memref<1x4x8x8xf32, #tpu.memory_space<vmem>>, %arg8: memref<8x32xf32, #tpu.memory_space<vmem>>) attributes {dimension_semantics = [#tpu.dimension_semantics<parallel>], iteration_bounds = array<i64: 2>, scalar_prefetch = 0 : i64, scratch_operands = 1 : i64, tpu.core_type = #tpu.core_type<tc>, window_params = [{transform_indices = @transform_0, window_bounds = array<i64: 1, 8, 33>}, {pipeline_mode = #tpu.pipeline_mode<synchronous>, transform_indices = @transform_1, window_bounds = array<i64: 33, 64>}, {pipeline_mode = #tpu.pipeline_mode<synchronous>, transform_indices = @transform_2, window_bounds = array<i64: 32, 32>}, {transform_indices = @transform_3, window_bounds = array<i64: 1, 8, 8>}, {transform_indices = @transform_4, window_bounds = array<i64: 1, 8, 8>}, {transform_indices = @transform_5, window_bounds = array<i64: 1, 8, 32>}, {transform_indices = @transform_6, window_bounds = array<i64: 1, 4, 8, 8>}]} {
    %c0 = arith.constant 0 : index
    %c0_0 = arith.constant 0 : index
    %c0_1 = arith.constant 0 : index
    %0 = vector.load %arg1[%c0, %c0_0, %c0_1] : memref<1x8x33xf32, #tpu.memory_space<vmem>>, vector<1x8x33xf32>
    %1 = vector.shape_cast %0 : vector<1x8x33xf32> to vector<8x33xf32>
    %2 = arith.truncf %1 : vector<8x33xf32> to vector<8x33xbf16>
    %c0_2 = arith.constant 0 : index
    %c0_3 = arith.constant 0 : index
    %3 = vector.load %arg2[%c0_2, %c0_3] : memref<33x64xbf16, #tpu.memory_space<vmem>>, vector<33x64xbf16>
    %cst = arith.constant dense<0.000000e+00> : vector<8x64xf32>
    %4 = tpu.matmul %2, %3, %cst {dimension_numbers = #tpu.dot_dimension_numbers<[1], [0], [0], [1], [0, 0, 1, 1], [], []>} : vector<8x33xbf16>, vector<33x64xbf16>, vector<8x64xf32> -> vector<8x64xf32>
    %5 = vector.extract_strided_slice %4 {offsets = [0, 0], sizes = [8, 8], strides = [1, 1]} : vector<8x64xf32> to vector<8x8xf32>
    %6 = vector.extract_strided_slice %4 {offsets = [0, 8], sizes = [8, 8], strides = [1, 1]} : vector<8x64xf32> to vector<8x8xf32>
    %7 = vector.extract_strided_slice %4 {offsets = [0, 16], sizes = [8, 8], strides = [1, 1]} : vector<8x64xf32> to vector<8x8xf32>
    %8 = vector.extract_strided_slice %4 {offsets = [0, 24], sizes = [8, 8], strides = [1, 1]} : vector<8x64xf32> to vector<8x8xf32>
    %9 = vector.shape_cast %5 : vector<8x8xf32> to vector<1x8x8xf32>
    %10 = vector.shape_cast %6 : vector<8x8xf32> to vector<1x8x8xf32>
    %11 = vector.shape_cast %7 : vector<8x8xf32> to vector<1x8x8xf32>
    %12 = vector.shape_cast %8 : vector<8x8xf32> to vector<1x8x8xf32>
    %13 = tpu.concatenate %9, %10, %11, %12 in 0 : vector<1x8x8xf32>, vector<1x8x8xf32>, vector<1x8x8xf32>, vector<1x8x8xf32> -> vector<4x8x8xf32>
    %14 = vector.extract_strided_slice %4 {offsets = [0, 32], sizes = [8, 8], strides = [1, 1]} : vector<8x64xf32> to vector<8x8xf32>
    %15 = vector.extract_strided_slice %4 {offsets = [0, 32], sizes = [8, 8], strides = [1, 1]} : vector<8x64xf32> to vector<8x8xf32>
    %16 = vector.extract_strided_slice %4 {offsets = [0, 40], sizes = [8, 8], strides = [1, 1]} : vector<8x64xf32> to vector<8x8xf32>
    %17 = vector.extract_strided_slice %4 {offsets = [0, 40], sizes = [8, 8], strides = [1, 1]} : vector<8x64xf32> to vector<8x8xf32>
    %18 = vector.shape_cast %14 : vector<8x8xf32> to vector<1x8x8xf32>
    %19 = vector.shape_cast %15 : vector<8x8xf32> to vector<1x8x8xf32>
    %20 = vector.shape_cast %16 : vector<8x8xf32> to vector<1x8x8xf32>
    %21 = vector.shape_cast %17 : vector<8x8xf32> to vector<1x8x8xf32>
    %22 = tpu.concatenate %18, %19, %20, %21 in 0 : vector<1x8x8xf32>, vector<1x8x8xf32>, vector<1x8x8xf32>, vector<1x8x8xf32> -> vector<4x8x8xf32>
    %23 = vector.extract_strided_slice %4 {offsets = [0, 48], sizes = [8, 8], strides = [1, 1]} : vector<8x64xf32> to vector<8x8xf32>
    %24 = vector.extract_strided_slice %4 {offsets = [0, 48], sizes = [8, 8], strides = [1, 1]} : vector<8x64xf32> to vector<8x8xf32>
    %25 = vector.extract_strided_slice %4 {offsets = [0, 56], sizes = [8, 8], strides = [1, 1]} : vector<8x64xf32> to vector<8x8xf32>
    %26 = vector.extract_strided_slice %4 {offsets = [0, 56], sizes = [8, 8], strides = [1, 1]} : vector<8x64xf32> to vector<8x8xf32>
    %27 = vector.shape_cast %23 : vector<8x8xf32> to vector<1x8x8xf32>
    %28 = vector.shape_cast %24 : vector<8x8xf32> to vector<1x8x8xf32>
    %29 = vector.shape_cast %25 : vector<8x8xf32> to vector<1x8x8xf32>
    %30 = vector.shape_cast %26 : vector<8x8xf32> to vector<1x8x8xf32>
    %31 = tpu.concatenate %27, %28, %29, %30 in 0 : vector<1x8x8xf32>, vector<1x8x8xf32>, vector<1x8x8xf32>, vector<1x8x8xf32> -> vector<4x8x8xf32>
    %c0_4 = arith.constant 0 : index
    %c0_5 = arith.constant 0 : index
    %c0_6 = arith.constant 0 : index
    %32 = vector.load %arg4[%c0_4, %c0_5, %c0_6] : memref<1x8x8xf32, #tpu.memory_space<vmem>>, vector<1x8x8xf32>
    %33 = vector.shape_cast %32 : vector<1x8x8xf32> to vector<8x8xf32>
    %34 = vector.shape_cast %33 : vector<8x8xf32> to vector<1x8x8xf32>
    %c0_7 = arith.constant 0 : index
    %c0_8 = arith.constant 0 : index
    %c0_9 = arith.constant 0 : index
    %35 = vector.load %arg5[%c0_7, %c0_8, %c0_9] : memref<1x8x8xf32, #tpu.memory_space<vmem>>, vector<1x8x8xf32>
    %36 = vector.shape_cast %35 : vector<1x8x8xf32> to vector<8x8xf32>
    %37 = vector.shape_cast %36 : vector<8x8xf32> to vector<1x8x8xf32>
    %38 = vector.extract_strided_slice %13 {offsets = [0, 0, 4], sizes = [4, 8, 4], strides = [1, 1, 1]} : vector<4x8x8xf32> to vector<4x8x4xf32>
    %cst_10 = arith.constant 0.000000e+00 : f32
    %39 = vector.broadcast %cst_10 : f32 to vector<4x8x4xf32>
    %40 = arith.subf %39, %38 : vector<4x8x4xf32>
    %41 = vector.extract_strided_slice %13 {offsets = [0, 0, 0], sizes = [4, 8, 4], strides = [1, 1, 1]} : vector<4x8x8xf32> to vector<4x8x4xf32>
    %42 = tpu.concatenate %40, %41 in 2 : vector<4x8x4xf32>, vector<4x8x4xf32> -> vector<4x8x8xf32>
    %43 = vector.broadcast %34 : vector<1x8x8xf32> to vector<4x8x8xf32>
    %44 = arith.mulf %13, %43 : vector<4x8x8xf32>
    %45 = vector.broadcast %37 : vector<1x8x8xf32> to vector<4x8x8xf32>
    %46 = arith.mulf %42, %45 : vector<4x8x8xf32>
    %47 = arith.addf %44, %46 : vector<4x8x8xf32>
    %cst_11 = arith.constant 0.353553385 : f32
    %48 = vector.broadcast %cst_11 : f32 to vector<4x8x8xf32>
    %49 = arith.mulf %47, %48 : vector<4x8x8xf32>
    %50 = vector.extract_strided_slice %22 {offsets = [0, 0, 4], sizes = [4, 8, 4], strides = [1, 1, 1]} : vector<4x8x8xf32> to vector<4x8x4xf32>
    %cst_12 = arith.constant 0.000000e+00 : f32
    %51 = vector.broadcast %cst_12 : f32 to vector<4x8x4xf32>
    %52 = arith.subf %51, %50 : vector<4x8x4xf32>
    %53 = vector.extract_strided_slice %22 {offsets = [0, 0, 0], sizes = [4, 8, 4], strides = [1, 1, 1]} : vector<4x8x8xf32> to vector<4x8x4xf32>
    %54 = tpu.concatenate %52, %53 in 2 : vector<4x8x4xf32>, vector<4x8x4xf32> -> vector<4x8x8xf32>
    %55 = vector.broadcast %34 : vector<1x8x8xf32> to vector<4x8x8xf32>
    %56 = arith.mulf %22, %55 : vector<4x8x8xf32>
    %57 = vector.broadcast %37 : vector<1x8x8xf32> to vector<4x8x8xf32>
    %58 = arith.mulf %54, %57 : vector<4x8x8xf32>
    %59 = arith.addf %56, %58 : vector<4x8x8xf32>
    %60 = tpu.iota {dimensions = array<i32: 0>} : vector<8x8xi32>
    %61 = tpu.iota {dimensions = array<i32: 1>} : vector<8x8xi32>
    %62 = arith.cmpi sle, %61, %60 : vector<8x8xi32>
    %cst_13 = arith.constant 0.000000e+00 : f32
    %cst_14 = arith.constant -1.000000e+09 : f32
    %63 = vector.broadcast %cst_13 : f32 to vector<8x8xf32>
    %64 = vector.broadcast %cst_14 : f32 to vector<8x8xf32>
    %65 = arith.select %62, %63, %64 : vector<8x8xi1>, vector<8x8xf32>
    %66 = arith.truncf %49 : vector<4x8x8xf32> to vector<4x8x8xbf16>
    %67 = arith.truncf %59 : vector<4x8x8xf32> to vector<4x8x8xbf16>
    "tpu.trace_start"() <{level = 10 : i32, message = "hqd,hkd->hqk"}> : () -> ()
    %cst_15 = arith.constant dense<0.000000e+00> : vector<4x8x8xf32>
    %68 = tpu.matmul %66, %67, %cst_15 {dimension_numbers = #tpu.dot_dimension_numbers<[2], [2], [1], [1], [0, 0, 0, 1, 1, 1], [0], [0]>} : vector<4x8x8xbf16>, vector<4x8x8xbf16>, vector<4x8x8xf32> -> vector<4x8x8xf32>
    "tpu.trace_stop"() : () -> ()
    %69 = vector.shape_cast %65 : vector<8x8xf32> to vector<1x8x8xf32>
    %70 = vector.broadcast %69 : vector<1x8x8xf32> to vector<4x8x8xf32>
    %71 = arith.addf %68, %70 : vector<4x8x8xf32>
    %cst_16 = arith.constant dense<0xFF800000> : vector<4x8xf32>
    %72 = vector.multi_reduction <maximumf>, %71, %cst_16 [2] : vector<4x8x8xf32> to vector<4x8xf32>
    %73 = vector.shape_cast %72 : vector<4x8xf32> to vector<4x8x1xf32>
    %74 = vector.broadcast %73 : vector<4x8x1xf32> to vector<4x8x8xf32>
    %75 = arith.subf %71, %74 : vector<4x8x8xf32>
    %76 = math.exp %75 : vector<4x8x8xf32>
    %cst_17 = arith.constant dense<0.000000e+00> : vector<4x8xf32>
    %77 = vector.multi_reduction <add>, %76, %cst_17 [2] : vector<4x8x8xf32> to vector<4x8xf32>
    %78 = vector.shape_cast %77 : vector<4x8xf32> to vector<4x8x1xf32>
    %79 = vector.broadcast %78 : vector<4x8x1xf32> to vector<4x8x8xf32>
    %80 = arith.divf %76, %79 : vector<4x8x8xf32>
    %81 = vector.shape_cast %80 : vector<4x8x8xf32> to vector<1x4x8x8xf32>
    %c0_18 = arith.constant 0 : index
    %c0_19 = arith.constant 0 : index
    %c0_20 = arith.constant 0 : index
    %c0_21 = arith.constant 0 : index
    %82 = vector.load %arg7[%c0_18, %c0_19, %c0_20, %c0_21] : memref<1x4x8x8xf32, #tpu.memory_space<vmem>>, vector<1x4x8x8xf32>
    tpu.vector_store %arg7[%c0_18, %c0_19, %c0_20, %c0_21], %81 {strides = array<i32>} : memref<1x4x8x8xf32, #tpu.memory_space<vmem>>, vector<1x4x8x8xf32>,
    %83 = arith.truncf %80 : vector<4x8x8xf32> to vector<4x8x8xbf16>
    %84 = arith.truncf %31 : vector<4x8x8xf32> to vector<4x8x8xbf16>
    "tpu.trace_start"() <{level = 10 : i32, message = "hqk,hkd->hqd"}> : () -> ()
    %cst_22 = arith.constant dense<0.000000e+00> : vector<4x8x8xf32>
    %85 = tpu.matmul %83, %84, %cst_22 {dimension_numbers = #tpu.dot_dimension_numbers<[2], [1], [1], [2], [0, 0, 0, 1, 1, 2], [0], [0]>} : vector<4x8x8xbf16>, vector<4x8x8xbf16>, vector<4x8x8xf32> -> vector<4x8x8xf32>
    "tpu.trace_stop"() : () -> ()
    %86 = vector.extract_strided_slice %85 {offsets = [0, 0, 0], sizes = [1, 8, 8], strides = [1, 1, 1]} : vector<4x8x8xf32> to vector<1x8x8xf32>
    %87 = vector.shape_cast %86 : vector<1x8x8xf32> to vector<8x8xf32>
    %c0_23 = arith.constant 0 : index
    %c0_24 = arith.constant 0 : index
    %88 = vector.load %arg8[%c0_23, %c0_24] : memref<8x32xf32, #tpu.memory_space<vmem>>, vector<8x8xf32>
    tpu.vector_store %arg8[%c0_23, %c0_24], %87 {strides = array<i32>} : memref<8x32xf32, #tpu.memory_space<vmem>>, vector<8x8xf32>,
    %89 = vector.extract_strided_slice %85 {offsets = [1, 0, 0], sizes = [1, 8, 8], strides = [1, 1, 1]} : vector<4x8x8xf32> to vector<1x8x8xf32>
    %90 = vector.shape_cast %89 : vector<1x8x8xf32> to vector<8x8xf32>
    %c0_25 = arith.constant 0 : index
    %c8 = arith.constant 8 : index
    %91 = vector.load %arg8[%c0_25, %c8] : memref<8x32xf32, #tpu.memory_space<vmem>>, vector<8x8xf32>
    tpu.vector_store %arg8[%c0_25, %c8], %90 {strides = array<i32>} : memref<8x32xf32, #tpu.memory_space<vmem>>, vector<8x8xf32>,
    %92 = vector.extract_strided_slice %85 {offsets = [2, 0, 0], sizes = [1, 8, 8], strides = [1, 1, 1]} : vector<4x8x8xf32> to vector<1x8x8xf32>
    %93 = vector.shape_cast %92 : vector<1x8x8xf32> to vector<8x8xf32>
    %c0_26 = arith.constant 0 : index
    %c16 = arith.constant 16 : index
    %94 = vector.load %arg8[%c0_26, %c16] : memref<8x32xf32, #tpu.memory_space<vmem>>, vector<8x8xf32>
    tpu.vector_store %arg8[%c0_26, %c16], %93 {strides = array<i32>} : memref<8x32xf32, #tpu.memory_space<vmem>>, vector<8x8xf32>,
    %95 = vector.extract_strided_slice %85 {offsets = [3, 0, 0], sizes = [1, 8, 8], strides = [1, 1, 1]} : vector<4x8x8xf32> to vector<1x8x8xf32>
    %96 = vector.shape_cast %95 : vector<1x8x8xf32> to vector<8x8xf32>
    %c0_27 = arith.constant 0 : index
    %c24 = arith.constant 24 : index
    %97 = vector.load %arg8[%c0_27, %c24] : memref<8x32xf32, #tpu.memory_space<vmem>>, vector<8x8xf32>
    tpu.vector_store %arg8[%c0_27, %c24], %96 {strides = array<i32>} : memref<8x32xf32, #tpu.memory_space<vmem>>, vector<8x8xf32>,
    %c0_28 = arith.constant 0 : index
    %c0_29 = arith.constant 0 : index
    %98 = vector.load %arg8[%c0_28, %c0_29] : memref<8x32xf32, #tpu.memory_space<vmem>>, vector<8x32xf32>
    %99 = arith.truncf %98 : vector<8x32xf32> to vector<8x32xbf16>
    %c0_30 = arith.constant 0 : index
    %c0_31 = arith.constant 0 : index
    %100 = vector.load %arg3[%c0_30, %c0_31] : memref<32x32xbf16, #tpu.memory_space<vmem>>, vector<32x32xbf16>
    %cst_32 = arith.constant dense<0.000000e+00> : vector<8x32xf32>
    %101 = tpu.matmul %99, %100, %cst_32 {dimension_numbers = #tpu.dot_dimension_numbers<[1], [0], [0], [1], [0, 0, 1, 1], [], []>} : vector<8x32xbf16>, vector<32x32xbf16>, vector<8x32xf32> -> vector<8x32xf32>
    %102 = vector.shape_cast %101 : vector<8x32xf32> to vector<1x8x32xf32>
    %c0_33 = arith.constant 0 : index
    %c0_34 = arith.constant 0 : index
    %c0_35 = arith.constant 0 : index
    %103 = vector.load %arg6[%c0_33, %c0_34, %c0_35] : memref<1x8x32xf32, #tpu.memory_space<vmem>>, vector<1x8x32xf32>
    tpu.vector_store %arg6[%c0_33, %c0_34, %c0_35], %102 {strides = array<i32>} : memref<1x8x32xf32, #tpu.memory_space<vmem>>, vector<1x8x32xf32>,
    return
  }
  func.func @transform_0(%arg0: i32) -> (i32, i32, i32) {
    %c0_i32 = arith.constant 0 : i32
    %c0_i32_0 = arith.constant 0 : i32
    %c0_i32_1 = arith.constant 0 : i32
    return %arg0, %c0_i32, %c0_i32_0 : i32, i32, i32
  }
  func.func @transform_1(%arg0: i32) -> (i32, i32) {
    %c0_i32 = arith.constant 0 : i32
    %c0_i32_0 = arith.constant 0 : i32
    %c0_i32_1 = arith.constant 0 : i32
    return %c0_i32, %c0_i32_0 : i32, i32
  }
  func.func @transform_2(%arg0: i32) -> (i32, i32) {
    %c0_i32 = arith.constant 0 : i32
    %c0_i32_0 = arith.constant 0 : i32
    %c0_i32_1 = arith.constant 0 : i32
    return %c0_i32, %c0_i32_0 : i32, i32
  }
  func.func @transform_3(%arg0: i32) -> (i32, i32, i32) {
    %c0_i32 = arith.constant 0 : i32
    %c0_i32_0 = arith.constant 0 : i32
    %c0_i32_1 = arith.constant 0 : i32
    return %arg0, %c0_i32, %c0_i32_0 : i32, i32, i32
  }
  func.func @transform_4(%arg0: i32) -> (i32, i32, i32) {
    %c0_i32 = arith.constant 0 : i32
    %c0_i32_0 = arith.constant 0 : i32
    %c0_i32_1 = arith.constant 0 : i32
    return %arg0, %c0_i32, %c0_i32_0 : i32, i32, i32
  }
  func.func @transform_5(%arg0: i32) -> (i32, i32, i32) {
    %c0_i32 = arith.constant 0 : i32
    %c0_i32_0 = arith.constant 0 : i32
    %c0_i32_1 = arith.constant 0 : i32
    return %arg0, %c0_i32, %c0_i32_0 : i32, i32, i32
  }
  func.func @transform_6(%arg0: i32) -> (i32, i32, i32, i32) {
    %c0_i32 = arith.constant 0 : i32
    %c0_i32_0 = arith.constant 0 : i32
    %c0_i32_1 = arith.constant 0 : i32
    %c0_i32_2 = arith.constant 0 : i32
    return %arg0, %c0_i32, %c0_i32_0, %c0_i32_1 : i32, i32, i32, i32
  }
}

</mosaic_0001>

<llo_original>
// kernel: tpu_custom_call.1
$region0: #{tpu_custom_call.1}
  #allocation0 [shape = 'u32[]', space=smem, size = 0x4, offset = 0x4, fixed_abs, tag = 'smem constant byte address 0x4 - core index']
  #allocation1 [shape = 'u32[144,128]{1,0:T(1,128)}', space=vmem, size = 0x12000, scoped, tag = 'internal scratch']
  #allocation2 [shape = 'f32[8,32]{1,0:T(8,128)}', space=vmem, size = 0x1000, scoped, tag = 'scratch operand']
  %s0 = inlined_call_operand.hbm [shape: f32[2,8,33], index: 0, kind: input, shape index: {}]
  %s1 = inlined_call_operand.hbm [shape: bf16[33,64], index: 1, kind: input, shape index: {}]
  %s2 = inlined_call_operand.hbm [shape: bf16[32,32], index: 2, kind: input, shape index: {}]
  %s3 = inlined_call_operand.hbm [shape: f32[2,8,8], index: 3, kind: input, shape index: {}]
  %s4 = inlined_call_operand.hbm [shape: f32[2,8,8], index: 4, kind: input, shape index: {}]
  %s5 = inlined_call_operand.hbm [shape: f32[2,8,32], index: 5, kind: output, shape index: {0}]
  %s6 = inlined_call_operand.hbm [shape: f32[2,4,8,8], index: 6, kind: output, shape index: {1}]
  %7 = xla_tuple %s5, %s6
  %s8 = sld [smem:[#allocation0]]
  $region81: #{tpu_custom_call.1} parent=0
    _
  %s10 = ssub.s32 1, %s8
  %s11 = scalar_select 0, %s10, %s8
  $region1: #{tpu_custom_call.1} parent=0
    #allocation3 [shape = 'u8[8192]{0}', space=vmem, size = 0x2000, scoped, tag = 'input window, operand 0']
    #allocation4 [shape = 's32[2]{0}', space=sflag, size = 0x8, scoped, tag = 'scoped memory for tpu_custom_call.1']
    #allocation5 [shape = 's32[2]{0}', space=sflag, size = 0x8, scoped, tag = 'scoped memory for tpu_custom_call.1']
    #allocation6 [shape = 'u8[10240]{0}', space=vmem, size = 0x2800, scoped, tag = 'input window, operand 1, single buffered']
    #allocation7 [shape = 's32[1]{0}', space=sflag, size = 0x4, scoped, tag = 'scoped memory for tpu_custom_call.1']
    #allocation8 [shape = 'u8[8192]{0}', space=vmem, size = 0x2000, scoped, tag = 'input window, operand 2, single buffered']
    #allocation9 [shape = 'u8[8192]{0}', space=vmem, size = 0x2000, scoped, tag = 'input window, operand 3']
    #allocation10 [shape = 's32[2]{0}', space=sflag, size = 0x8, scoped, tag = 'scoped memory for tpu_custom_call.1']
    #allocation11 [shape = 'u8[8192]{0}', space=vmem, size = 0x2000, scoped, tag = 'input window, operand 4']
    #allocation12 [shape = 'u8[8192]{0}', space=vmem, size = 0x2000, scoped, tag = 'output window, operand 0']
    #allocation13 [shape = 'u8[32768]{0}', space=vmem, size = 0x8000, scoped, tag = 'output window, operand 1']
    #allocation14 [shape = 's32[2]{0}', space=sflag, size = 0x8, scoped, tag = 'scoped memory for tpu_custom_call.1']
    %12 = vsyncpa [#allocation4], 0
    %s13 = scalar_lea.sflag [#allocation4], 1
    %14 = vsyncpa %s13, 0
    %15 = vsyncpa [#allocation7], 0
    %16 = vsyncpa [#allocation10], 0
    %s17 = scalar_lea.sflag [#allocation10], 1
    %18 = vsyncpa %s17, 0
    %19 = vsyncpa [#allocation5], 0
    %s20 = scalar_lea.sflag [#allocation5], 1
    %21 = vsyncpa %s20, 0
    %22 = vsyncpa [#allocation14], 0
    %s23 = scalar_lea.sflag [#allocation14], 1
    %24 = vsyncpa %s23, 0
    loop: start=0, step=1, limit=4
    $region2: #{tpu_custom_call.1} parent=1 // loop_pre_header
      _
    $region3: #{tpu_custom_call.1} parent=1 // loop_header
      %s26 = sphi 0, %s30
      %p27 = scmp.ge.s32.totalorder %s26, 4
      %s36 = sphi 0, %s38
      %s39 = sphi 0, %s36
      %s40 = sphi 0, %s39
      %s56 = sphi 0, %s40
      %s60 = sphi 0, %s60
      %s62 = sphi 0, %s60
      %s63 = sphi 0, %s62
      %s77 = sphi 0, %s63
      %s81 = sphi 0, %s81
      %s83 = sphi 0, %s81
      %s84 = sphi 0, %s83
      %s98 = sphi 0, %s84
      %s104 = sphi 0, %s106
      %s107 = sphi 0, %s104
      %s108 = sphi 0, %s107
      %s124 = sphi 0, %s108
      %s130 = sphi 0, %s132
      %s133 = sphi 0, %s130
      %s134 = sphi 0, %s133
      %s150 = sphi 0, %s134
      %s156 = sphi 0, %s158
      %s159 = sphi 0, %s156
      %s160 = sphi 0, %s159
      %s176 = sphi 0, %s160
      %s182 = sphi 0, %s184
      %s185 = sphi 0, %s182
      %s186 = sphi 0, %s185
      %s202 = sphi 0, %s186
    $region4: #{tpu_custom_call.1} parent=1 // loop_header_branch
      %29 = sbr.rel (%p27) target = $region8
    $region5: #{tpu_custom_call.1} parent=1 // loop_body
      %s31 = ssub.s32 %s26, 1
      %s32 = ssub.s32 %s26, 2
      %s33 = sadd.s32 %s26, 1
      %s34 = ssub.s32 %s26, %s33
      %p35 = scmp.eq.s32.totalorder %s34, 0
      %s37 = sadd.s32 %s36, 1
      %s38 = scalar_select %p35, %s36, %s37
      %p41 = pneg %p35
      %p42 = scmp.eq.s32.totalorder %s26, 1
      %p43 = por %p41, %p42
      %p44 = scmp.ne.s32.totalorder %s36, %s39
      %p45 = scmp.eq.s32.totalorder %s26, 0
      %p46 = por %p44, %p45
      %p47 = scmp.ne.s32.totalorder %s36, %s39
      %p48 = scmp.eq.s32.totalorder %s31, 1
      %p49 = por %p47, %p48
      %p50 = scmp.ne.s32.totalorder %s39, %s40
      %p51 = scmp.eq.s32.totalorder %s31, 0
      %p52 = por %p50, %p51
      %p53 = scmp.ne.s32.totalorder %s39, %s40
      %p54 = scmp.eq.s32.totalorder %s32, 1
      %p55 = por %p53, %p54
      %p57 = scmp.ne.s32.totalorder %s40, %s56
      %p58 = scmp.eq.s32.totalorder %s32, 0
      %p59 = por %p57, %p58
      %s61 = sadd.s32 %s60, 1
      %p64 = scmp.eq.s32.totalorder %s26, 1
      %p65 = scmp.ne.s32.totalorder %s60, %s62
      %p66 = scmp.eq.s32.totalorder %s26, 0
      %p67 = por %p65, %p66
      %p68 = scmp.ne.s32.totalorder %s60, %s62
      %p69 = scmp.eq.s32.totalorder %s31, 1
      %p70 = por %p68, %p69
      %p71 = scmp.ne.s32.totalorder %s62, %s63
      %p72 = scmp.eq.s32.totalorder %s31, 0
      %p73 = por %p71, %p72
      %p74 = scmp.ne.s32.totalorder %s62, %s63
      %p75 = scmp.eq.s32.totalorder %s32, 1
      %p76 = por %p74, %p75
      %p78 = scmp.ne.s32.totalorder %s63, %s77
      %p79 = scmp.eq.s32.totalorder %s32, 0
      %p80 = por %p78, %p79
      %s82 = sadd.s32 %s81, 1
      %p85 = scmp.eq.s32.totalorder %s26, 1
      %p86 = scmp.ne.s32.totalorder %s81, %s83
      %p87 = scmp.eq.s32.totalorder %s26, 0
      %p88 = por %p86, %p87
      %p89 = scmp.ne.s32.totalorder %s81, %s83
      %p90 = scmp.eq.s32.totalorder %s31, 1
      %p91 = por %p89, %p90
      %p92 = scmp.ne.s32.totalorder %s83, %s84
      %p93 = scmp.eq.s32.totalorder %s31, 0
      %p94 = por %p92, %p93
      %p95 = scmp.ne.s32.totalorder %s83, %s84
      %p96 = scmp.eq.s32.totalorder %s32, 1
      %p97 = por %p95, %p96
      %p99 = scmp.ne.s32.totalorder %s84, %s98
      %p100 = scmp.eq.s32.totalorder %s32, 0
      %p101 = por %p99, %p100
      %s102 = ssub.s32 %s26, %s33
      %p103 = scmp.eq.s32.totalorder %s102, 0
      %s105 = sadd.s32 %s104, 1
      %s106 = scalar_select %p103, %s104, %s105
      %p109 = pneg %p103
      %p110 = scmp.eq.s32.totalorder %s26, 1
      %p111 = por %p109, %p110
      %p112 = scmp.ne.s32.totalorder %s104, %s107
      %p113 = scmp.eq.s32.totalorder %s26, 0
      %p114 = por %p112, %p113
      %p115 = scmp.ne.s32.totalorder %s104, %s107
      %p116 = scmp.eq.s32.totalorder %s31, 1
      %p117 = por %p115, %p116
      %p118 = scmp.ne.s32.totalorder %s107, %s108
      %p119 = scmp.eq.s32.totalorder %s31, 0
      %p120 = por %p118, %p119
      %p121 = scmp.ne.s32.totalorder %s107, %s108
      %p122 = scmp.eq.s32.totalorder %s32, 1
      %p123 = por %p121, %p122
      %p125 = scmp.ne.s32.totalorder %s108, %s124
      %p126 = scmp.eq.s32.totalorder %s32, 0
      %p127 = por %p125, %p126
      %s128 = ssub.s32 %s26, %s33
      %p129 = scmp.eq.s32.totalorder %s128, 0
      %s131 = sadd.s32 %s130, 1
      %s132 = scalar_select %p129, %s130, %s131
      %p135 = pneg %p129
      %p136 = scmp.eq.s32.totalorder %s26, 1
      %p137 = por %p135, %p136
      %p138 = scmp.ne.s32.totalorder %s130, %s133
      %p139 = scmp.eq.s32.totalorder %s26, 0
      %p140 = por %p138, %p139
      %p141 = scmp.ne.s32.totalorder %s130, %s133
      %p142 = scmp.eq.s32.totalorder %s31, 1
      %p143 = por %p141, %p142
      %p144 = scmp.ne.s32.totalorder %s133, %s134
      %p145 = scmp.eq.s32.totalorder %s31, 0
      %p146 = por %p144, %p145
      %p147 = scmp.ne.s32.totalorder %s133, %s134
      %p148 = scmp.eq.s32.totalorder %s32, 1
      %p149 = por %p147, %p148
      %p151 = scmp.ne.s32.totalorder %s134, %s150
      %p152 = scmp.eq.s32.totalorder %s32, 0
      %p153 = por %p151, %p152
      %s154 = ssub.s32 %s26, %s33
      %p155 = scmp.eq.s32.totalorder %s154, 0
      %s157 = sadd.s32 %s156, 1
      %s158 = scalar_select %p155, %s156, %s157
      %p161 = pneg %p155
      %p162 = scmp.eq.s32.totalorder %s26, 1
      %p163 = por %p161, %p162
      %p164 = scmp.ne.s32.totalorder %s156, %s159
      %p165 = scmp.eq.s32.totalorder %s26, 0
      %p166 = por %p164, %p165
      %p167 = scmp.ne.s32.totalorder %s156, %s159
      %p168 = scmp.eq.s32.totalorder %s31, 1
      %p169 = por %p167, %p168
      %p170 = scmp.ne.s32.totalorder %s159, %s160
      %p171 = scmp.eq.s32.totalorder %s31, 0
      %p172 = por %p170, %p171
      %p173 = scmp.ne.s32.totalorder %s159, %s160
      %p174 = scmp.eq.s32.totalorder %s32, 1
      %p175 = por %p173, %p174
      %p177 = scmp.ne.s32.totalorder %s160, %s176
      %p178 = scmp.eq.s32.totalorder %s32, 0
      %p179 = por %p177, %p178
      %s180 = ssub.s32 %s26, %s33
      %p181 = scmp.eq.s32.totalorder %s180, 0
      %s183 = sadd.s32 %s182, 1
      %s184 = scalar_select %p181, %s182, %s183
      %p187 = pneg %p181
      %p188 = scmp.eq.s32.totalorder %s26, 1
      %p189 = por %p187, %p188
      %p190 = scmp.ne.s32.totalorder %s182, %s185
      %p191 = scmp.eq.s32.totalorder %s26, 0
      %p192 = por %p190, %p191
      %p193 = scmp.ne.s32.totalorder %s182, %s185
      %p194 = scmp.eq.s32.totalorder %s31, 1
      %p195 = por %p193, %p194
      %p196 = scmp.ne.s32.totalorder %s185, %s186
      %p197 = scmp.eq.s32.totalorder %s31, 0
      %p198 = por %p196, %p197
      %p199 = scmp.ne.s32.totalorder %s185, %s186
      %p200 = scmp.eq.s32.totalorder %s32, 1
      %p201 = por %p199, %p200
      %p203 = scmp.ne.s32.totalorder %s186, %s202
      %p204 = scmp.eq.s32.totalorder %s32, 0
      %p205 = por %p203, %p204
      %p206 = scmp.le.s32.totalorder 1, %s26
      %p207 = scmp.lt.s32.totalorder %s26, 3
      %p208 = pnand %p206, %p207
      %p209 = pneg %p208
      // Predicated region
      $region9: #{tpu_custom_call.1} parent=5 // pred_check
        _
      $region10: #{tpu_custom_call.1} parent=5 // pred_check_branch
        %211 = sbr.rel (%p208) target = $region12
      $region11: #{tpu_custom_call.1} parent=5 // pred_region
        %s212 = ssub.s32 %s26, 1
        // Predicated region
        $region13: #{tpu_custom_call.1} parent=11 // pred_check
          %p213 = pneg %p73
        $region14: #{tpu_custom_call.1} parent=11 // pred_check_branch
          %215 = sbr.rel (%p213) target = $region16
        $region15: #{tpu_custom_call.1} parent=11 // pred_region
          %s217 = ssub.s32 320, 320
          %218 = vsyncadd [#allocation7], %s217
          %s219 = sshll.u32 [#allocation6], 4
          %s220 = int_to_ptr.vmem [resolvable:$true] %s219
          %225 = dma.hbm_to_vmem [thread:$0]  %s1, 320, %s220, [#allocation7], 64, 64, 4
        $region16: #{tpu_custom_call.1} parent=11 // pred_fallthru
          _
        // Predicated region
        $region17: #{tpu_custom_call.1} parent=11 // pred_check
          %p226 = pneg %p94
        $region18: #{tpu_custom_call.1} parent=11 // pred_check_branch
          %228 = sbr.rel (%p226) target = $region20
        $region19: #{tpu_custom_call.1} parent=11 // pred_region
          %s230 = ssub.s32 256, 256
          %231 = vsyncadd [#allocation7], %s230
          %s232 = sshll.u32 [#allocation8], 4
          %s233 = int_to_ptr.vmem [resolvable:$true] %s232
          %238 = dma.hbm_to_vmem [thread:$0]  %s2, 256, %s233, [#allocation7], 64, 64, 4
        $region20: #{tpu_custom_call.1} parent=11 // pred_fallthru
          _
      $region12: #{tpu_custom_call.1} parent=5 // pred_fallthru
        _
      %p239 = scmp.lt.s32.totalorder %s26, 2
      // Predicated region
      $region21: #{tpu_custom_call.1} parent=5 // pred_check
        %p240 = pneg %p239
      $region22: #{tpu_custom_call.1} parent=5 // pred_check_branch
        %242 = sbr.rel (%p240) target = $region24
      $region23: #{tpu_custom_call.1} parent=5 // pred_region
        // Predicated region
        $region25: #{tpu_custom_call.1} parent=23 // pred_check
          %p243 = pneg %p46
        $region26: #{tpu_custom_call.1} parent=23 // pred_check_branch
          %245 = sbr.rel (%p243) target = $region28
        $region27: #{tpu_custom_call.1} parent=23 // pred_region
          %s246 = sand.u32 %s36, 1
          %s247 = scalar_lea.sflag [#allocation4], %s246
          %s248 = sand.u32 %s36, 1
          %s249 = smul.addr %s248, 8
          %s250 = scalar_lea.vmem [#allocation3], %s249
          %s252 = ssub.s32 128, 128
          %253 = vsyncadd %s247, %s252
          %s254 = smul.addr %s26, 128
          %s255 = scalar_lea.hbm %s0, %s254
          %s257 = sshll.u32 %s250, 4
          %s258 = int_to_ptr.vmem [resolvable:$true] %s257
          %260 = dma.hbm_to_vmem [thread:$0]  %s255, 128, %s258, %s247
        $region28: #{tpu_custom_call.1} parent=23 // pred_fallthru
          _
        // Predicated region
        $region29: #{tpu_custom_call.1} parent=23 // pred_check
          %p261 = pneg %p114
        $region30: #{tpu_custom_call.1} parent=23 // pred_check_branch
          %263 = sbr.rel (%p261) target = $region32
        $region31: #{tpu_custom_call.1} parent=23 // pred_region
          %s264 = sand.u32 %s26, 1
          %s265 = scalar_lea.sflag [#allocation10], %s264
          %s266 = sand.u32 %s104, 1
          %s267 = smul.addr %s266, 8
          %s268 = scalar_lea.vmem [#allocation9], %s267
          %s270 = ssub.s32 128, 128
          %271 = vsyncadd %s265, %s270
          %s272 = smul.addr %s26, 128
          %s273 = scalar_lea.hbm %s3, %s272
          %s275 = sshll.u32 %s268, 4
          %s276 = int_to_ptr.vmem [resolvable:$true] %s275
          %278 = dma.hbm_to_vmem [thread:$0]  %s273, 128, %s276, %s265
        $region32: #{tpu_custom_call.1} parent=23 // pred_fallthru
          _
        // Predicated region
        $region33: #{tpu_custom_call.1} parent=23 // pred_check
          %p279 = pneg %p140
        $region34: #{tpu_custom_call.1} parent=23 // pred_check_branch
          %281 = sbr.rel (%p279) target = $region36
        $region35: #{tpu_custom_call.1} parent=23 // pred_region
          %s282 = sand.u32 %s26, 1
          %s283 = scalar_lea.sflag [#allocation10], %s282
          %s284 = sand.u32 %s130, 1
          %s285 = smul.addr %s284, 8
          %s286 = scalar_lea.vmem [#allocation11], %s285
          %s288 = ssub.s32 128, 128
          %289 = vsyncadd %s283, %s288
          %s290 = smul.addr %s26, 128
          %s291 = scalar_lea.hbm %s4, %s290
          %s293 = sshll.u32 %s286, 4
          %s294 = int_to_ptr.vmem [resolvable:$true] %s293
          %296 = dma.hbm_to_vmem [thread:$0]  %s291, 128, %s294, %s283
        $region36: #{tpu_custom_call.1} parent=23 // pred_fallthru
          _
      $region24: #{tpu_custom_call.1} parent=5 // pred_fallthru
        _
      %p297 = scmp.le.s32.totalorder 1, %s26
      %p298 = scmp.lt.s32.totalorder %s26, 3
      %p299 = pnand %p297, %p298
      %p300 = pneg %p299
      // Predicated region
      $region37: #{tpu_custom_call.1} parent=5 // pred_check
        _
      $region38: #{tpu_custom_call.1} parent=5 // pred_check_branch
        %302 = sbr.rel (%p299) target = $region40
      $region39: #{tpu_custom_call.1} parent=5 // pred_region
        %s303 = ssub.s32 %s26, 1
        %s304 = sand.u32 %s39, 1
        %s305 = scalar_lea.sflag [#allocation4], %s304
        %s306 = sand.u32 %s39, 1
        %s307 = smul.addr %s306, 8
        %s308 = scalar_lea.vmem [#allocation3], %s307
        // Predicated region
        $region41: #{tpu_custom_call.1} parent=39 // pred_check
          %p309 = pneg %p52
        $region42: #{tpu_custom_call.1} parent=39 // pred_check_branch
          %311 = sbr.rel (%p309) target = $region44
        $region43: #{tpu_custom_call.1} parent=39 // pred_region
          %312 = dma.done %s305, 128
        $region44: #{tpu_custom_call.1} parent=39 // pred_fallthru
          _
        // Predicated region
        $region45: #{tpu_custom_call.1} parent=39 // pred_check
          %p313 = pneg %p73
        $region46: #{tpu_custom_call.1} parent=39 // pred_check_branch
          %315 = sbr.rel (%p313) target = $region48
        $region47: #{tpu_custom_call.1} parent=39 // pred_region
          %316 = dma.done [#allocation7], 320
        $region48: #{tpu_custom_call.1} parent=39 // pred_fallthru
          _
        // Predicated region
        $region49: #{tpu_custom_call.1} parent=39 // pred_check
          %p317 = pneg %p94
        $region50: #{tpu_custom_call.1} parent=39 // pred_check_branch
          %319 = sbr.rel (%p317) target = $region52
        $region51: #{tpu_custom_call.1} parent=39 // pred_region
          %320 = dma.done [#allocation7], 256
        $region52: #{tpu_custom_call.1} parent=39 // pred_fallthru
          _
        %s321 = sand.u32 %s31, 1
        %s322 = scalar_lea.sflag [#allocation10], %s321
        %s323 = sand.u32 %s107, 1
        %s324 = smul.addr %s323, 8
        %s325 = scalar_lea.vmem [#allocation9], %s324
        // Predicated region
        $region53: #{tpu_custom_call.1} parent=39 // pred_check
          %p326 = pneg %p120
        $region54: #{tpu_custom_call.1} parent=39 // pred_check_branch
          %328 = sbr.rel (%p326) target = $region56
        $region55: #{tpu_custom_call.1} parent=39 // pred_region
          %329 = dma.done %s322, 128
        $region56: #{tpu_custom_call.1} parent=39 // pred_fallthru
          _
        %s330 = sand.u32 %s31, 1
        %s331 = scalar_lea.sflag [#allocation10], %s330
        %s332 = sand.u32 %s133, 1
        %s333 = smul.addr %s332, 8
        %s334 = scalar_lea.vmem [#allocation11], %s333
        // Predicated region
        $region57: #{tpu_custom_call.1} parent=39 // pred_check
          %p335 = pneg %p146
        $region58: #{tpu_custom_call.1} parent=39 // pred_check_branch
          %337 = sbr.rel (%p335) target = $region60
        $region59: #{tpu_custom_call.1} parent=39 // pred_region
          %338 = dma.done %s331, 128
        $region60: #{tpu_custom_call.1} parent=39 // pred_fallthru
          _
        %s339 = sand.u32 %s39, 1
        %s340 = scalar_lea.sflag [#allocation4], %s339
        %s341 = sand.u32 %s39, 1
        %s342 = smul.addr %s341, 8
        %s343 = scalar_lea.vmem [#allocation3], %s342
        %p344 = pneg %p52
        %p345 = pneg %p49
        %p346 = pneg %p73
        %p347 = pneg %p70
        %p348 = pneg %p94
        %p349 = pneg %p91
        %s350 = sand.u32 %s31, 1
        %s351 = scalar_lea.sflag [#allocation10], %s350
        %s352 = sand.u32 %s107, 1
        %s353 = smul.addr %s352, 8
        %s354 = scalar_lea.vmem [#allocation9], %s353
        %p355 = pneg %p120
        %p356 = pneg %p117
        %s357 = sand.u32 %s31, 1
        %s358 = scalar_lea.sflag [#allocation10], %s357
        %s359 = sand.u32 %s133, 1
        %s360 = smul.addr %s359, 8
        %s361 = scalar_lea.vmem [#allocation11], %s360
        %p362 = pneg %p146
        %p363 = pneg %p143
        %p364 = pneg %p172
        %p365 = pneg %p169
        %s366 = sand.u32 %s159, 1
        %s367 = scalar_lea.sflag [#allocation5], %s366
        %s368 = sand.u32 %s159, 1
        %s369 = smul.addr %s368, 8
        %s370 = scalar_lea.vmem [#allocation12], %s369
        %p371 = pneg %p198
        %p372 = pneg %p195
        %s373 = sand.u32 %s185, 1
        %s374 = scalar_lea.sflag [#allocation14], %s373
        %s375 = sand.u32 %s185, 1
        %s376 = smul.addr %s375, 32
        %s377 = scalar_lea.vmem [#allocation13], %s376
        %v379 = vld [vmem:[%s308] sm:$0xff]
        %v380 = vpack.c.bf16 %v379, %v379
        %v381 = vld [vmem:[#allocation6] sm:$0xf]
        %v382 = vld [vmem:[#allocation6 + $0x4] sm:$0xf]
        %v383 = vld [vmem:[#allocation6 + $0x8] sm:$0xf]
        %v384 = vld [vmem:[#allocation6 + $0xc] sm:$0xf]
        %v385 = vld [vmem:[#allocation6 + $0x10] sm:$0x1]
        %v391 = vunpack.c.l.b16 %v381
        %v392 = vunpack.c.l.b16 %v382
        %v393 = vunpack.c.l.b16 %v383
        %v394 = vunpack.c.l.b16 %v384
        %v395 = vunpack.c.l.b16 %v385
        %v396 = vpack.c.b16 %v392, %v391
        %v397 = vpack.c.b16 %v394, %v393
        %v398 = vpack.c.b16 %v395, %v395
        %vm401 = vcmask 269312
        %v403 = vsel %vm401, %v380, 0
        %vm405 = vcmask 1040384
        %v406 = vsel 0, 4294967295, 65535
        %v407 = vsel %vm405, %v406, 0
        %v409 = vand.u32 %v398, %v407
        %411 = vmatprep.subr.bf16.mxu0 0
        %412 = vmatpush1.bf16.msra.mxu0 %v396
        %413 = vmatprep.subr.bf16.mxu0 0
        %414 = vmatpush1.bf16.msra.mxu0 %v397
        %415 = vmatprep.subr.bf16.mxu0 0
        %416 = vmatpush1.bf16.msra.mxu0 %v409
        %417 = vmatprep.subr.bf16.mxu0 0
        %418 = vmatpush1.bf16.msra.mxu0 0
        %419 = vmatprep.subr.bf16.mxu0 0
        %420 = vmatpush1.bf16.msra.mxu0 0
        %421 = vmatprep.subr.bf16.mxu0 0
        %422 = vmatpush1.bf16.msra.mxu0 0
        %423 = vmatprep.subr.bf16.mxu0 0
        %424 = vmatpush1.bf16.msra.mxu0 0
        %425 = vmatprep.subr.bf16.mxu0 0
        %426 = vmatpush1.bf16.msra.mxu0 0
        %427 = vmatprep.subr.bf16.mxu0 0
        %428 = vmatpush1.bf16.msra.mxu0 0
        %429 = vmatprep.subr.bf16.mxu0 0
        %430 = vmatpush1.bf16.msra.mxu0 0
        %431 = vmatprep.subr.bf16.mxu0 0
        %432 = vmatpush1.bf16.msra.mxu0 0
        %433 = vmatprep.subr.bf16.mxu0 0
        %434 = vmatpush1.bf16.msra.mxu0 0
        %435 = vmatprep.subr.bf16.mxu0 0
        %436 = vmatpush1.bf16.msra.mxu0 0
        %437 = vmatprep.subr.bf16.mxu0 0
        %438 = vmatpush1.bf16.msra.mxu0 0
        %439 = vmatprep.subr.bf16.mxu0 0
        %440 = vmatpush1.bf16.msra.mxu0 0
        %441 = vmatprep.subr.bf16.mxu0 0
        %442 = vmatpush1.bf16.msra.mxu0 0
        %443 = vmatprep.mubr.bf16.mxu0 0
        %444 = vmatmul.mubr.bf16.gmra.mrb[0].mxu0 %v403
        %v445 = vpop.f32.mrb[0].mxu0
        %v446 = vadd.f32 0.0, %v445
        %v447 = vpop.f32.mrb[0].mxu0
        %v448 = vpop.f32.mrb[0].mxu0
        %v449 = vpop.f32.mrb[0].mxu0
        %450 = vdwg.mxu0
        %452 = vrot.lane.b32.xlu0 %v446, 120
        %v453 = vpop.permute.xlu0 %452
        %455 = vrot.lane.b32.xlu0 %v446, 112
        %v456 = vpop.permute.xlu0 %455
        %458 = vrot.lane.b32.xlu0 %v446, 104
        %v459 = vpop.permute.xlu0 %458
        %v461 = vld [vmem:[%s325] sm:$0xff]
        %v462 = vld [vmem:[%s334] sm:$0xff]
        %v463 = vsub.f32 0.0, %v446
        %v464 = vsub.f32 0.0, %v453
        %v465 = vsub.f32 0.0, %v456
        %v466 = vsub.f32 0.0, %v459
        %471 = vrot.lane.b32.xlu0 %v463, 124
        %v472 = vpop.permute.xlu0 %471
        %473 = vrot.lane.b32.xlu0 %v464, 124
        %v474 = vpop.permute.xlu0 %473
        %475 = vrot.lane.b32.xlu0 %v465, 124
        %v476 = vpop.permute.xlu0 %475
        %477 = vrot.lane.b32.xlu0 %v466, 124
        %v478 = vpop.permute.xlu0 %477
        %483 = vrot.lane.b32.xlu0 %v446, 4
        %v484 = vpop.permute.xlu0 %483
        %485 = vrot.lane.b32.xlu0 %v453, 4
        %v486 = vpop.permute.xlu0 %485
        %487 = vrot.lane.b32.xlu0 %v456, 4
        %v488 = vpop.permute.xlu0 %487
        %489 = vrot.lane.b32.xlu0 %v459, 4
        %v490 = vpop.permute.xlu0 %489
        %vm495 = vcmask 31744
        %v496 = vsel %vm495, %v472, %v484
        %v497 = vsel %vm495, %v474, %v486
        %v498 = vsel %vm495, %v476, %v488
        %v499 = vsel %vm495, %v478, %v490
        %v500 = vmul.f32 %v446, %v461
        %v501 = vmul.f32 %v453, %v461
        %v502 = vmul.f32 %v456, %v461
        %v503 = vmul.f32 %v459, %v461
        %v504 = vmul.f32 %v496, %v462
        %v505 = vmul.f32 %v497, %v462
        %v506 = vmul.f32 %v498, %v462
        %v507 = vmul.f32 %v499, %v462
        %v508 = vadd.f32 %v500, %v504
        %v509 = vadd.f32 %v501, %v505
        %v510 = vadd.f32 %v502, %v506
        %v511 = vadd.f32 %v503, %v507
        %v512 = vmul.f32 %v508, 0.35355338
        %v513 = vmul.f32 %v509, 0.35355338
        %v514 = vmul.f32 %v510, 0.35355338
        %v515 = vmul.f32 %v511, 0.35355338
        %516 = vrot.lane.b32.xlu0 %v463, 92
        %v517 = vpop.permute.xlu0 %516
        %518 = vrot.lane.b32.xlu0 %v464, 92
        %v519 = vpop.permute.xlu0 %518
        %522 = vrot.lane.b32.xlu0 %v446, 100
        %v523 = vpop.permute.xlu0 %522
        %524 = vrot.lane.b32.xlu0 %v453, 100
        %v525 = vpop.permute.xlu0 %524
        %v528 = vsel %vm495, %v517, %v523
        %v529 = vsel %vm495, %v519, %v525
        %531 = vrot.lane.b32.xlu0 %v461, 32
        %v532 = vpop.permute.xlu0 %531
        %v534 = vmul.f32 %v446, %v532
        %v535 = vmul.f32 %v453, %v532
        %v536 = vmul.f32 %v528, %v462
        %v537 = vmul.f32 %v529, %v462
        %540 = vrot.lane.b32.xlu0 %v536, 32
        %v541 = vpop.permute.xlu0 %540
        %542 = vrot.lane.b32.xlu0 %v537, 32
        %v543 = vpop.permute.xlu0 %542
        %v546 = vadd.f32 %v534, %v541
        %v547 = vadd.f32 %v535, %v543
        %v548 = vlaneseq
        %v549 = vshrl.u32 %v548, 7
        %v550 = vlaneseq
        %v551 = vand.u32 %v550, 127
        %vm552 = vcmp.le.s32.totalorder %v551, %v549
        %v553 = vsel %vm552, 0.0, -1e+09
        %v554 = vpack.c.bf16 %v512, %v512
        %v555 = vpack.c.bf16 %v513, %v513
        %v556 = vpack.c.bf16 %v514, %v514
        %v557 = vpack.c.bf16 %v515, %v515
        %v558 = vpack.c.bf16 %v546, %v546
        %v559 = vpack.c.bf16 %v547, %v547
        %561 = vrot.lane.b32.xlu0 %v558, 96
        %v562 = vpop.permute.xlu0 %561
        %vm563 = vcmask 64512
        %v565 = vsel %vm563, %v554, 0
        %v568 = vsel %vm563, %v562, 0
        %570 = vmatprep.subr.bf16.mxu0 0
        %571 = vmatpush1.bf16.xpose.msra.mxu0 %v568
        %572 = vmatprep.subr.bf16.mxu0 0
        %573 = vmatpush1.bf16.xpose.msra.mxu0 0
        %574 = vmatprep.subr.bf16.mxu0 0
        %575 = vmatpush1.bf16.xpose.msra.mxu0 0
        %576 = vmatprep.subr.bf16.mxu0 0
        %577 = vmatpush1.bf16.xpose.msra.mxu0 0
        %578 = vmatprep.subr.bf16.mxu0 0
        %579 = vmatpush1.bf16.xpose.msra.mxu0 0
        %580 = vmatprep.subr.bf16.mxu0 0
        %581 = vmatpush1.bf16.xpose.msra.mxu0 0
        %582 = vmatprep.subr.bf16.mxu0 0
        %583 = vmatpush1.bf16.xpose.msra.mxu0 0
        %584 = vmatprep.subr.bf16.mxu0 0
        %585 = vmatpush1.bf16.xpose.msra.mxu0 0
        %586 = vmatprep.subr.bf16.mxu0 0
        %587 = vmatpush1.bf16.xpose.msra.mxu0 0
        %588 = vmatprep.subr.bf16.mxu0 0
        %589 = vmatpush1.bf16.xpose.msra.mxu0 0
        %590 = vmatprep.subr.bf16.mxu0 0
        %591 = vmatpush1.bf16.xpose.msra.mxu0 0
        %592 = vmatprep.subr.bf16.mxu0 0
        %593 = vmatpush1.bf16.xpose.msra.mxu0 0
        %594 = vmatprep.subr.bf16.mxu0 0
        %595 = vmatpush1.bf16.xpose.msra.mxu0 0
        %596 = vmatprep.subr.bf16.mxu0 0
        %597 = vmatpush1.bf16.xpose.msra.mxu0 0
        %598 = vmatprep.subr.bf16.mxu0 0
        %599 = vmatpush1.bf16.xpose.msra.mxu0 0
        %600 = vmatprep.subr.bf16.mxu0 0
        %601 = vmatpush1.bf16.xpose.msra.mxu0 0
        %602 = vmatprep.mubr.bf16.mxu0 0
        %603 = vmatmul.mubr.bf16.gmra.mrb[0].mxu0 %v565
        %v604 = vpop.f32.mrb[0].mxu0
        %v605 = vadd.f32 %v553, %v604
        %v606 = vpop.f32.mrb[0].mxu0
        %v607 = vpop.f32.mrb[0].mxu0
        %v608 = vpop.f32.mrb[0].mxu0
        %609 = vdwg.mxu0
        %v611 = vsel %vm563, %v555, 0
        %613 = vmatprep.subr.bf16.mxu0 0
        %614 = vmatpush1.bf16.xpose.msra.mxu0 %v568
        %615 = vmatprep.subr.bf16.mxu0 0
        %616 = vmatpush1.bf16.xpose.msra.mxu0 0
        %617 = vmatprep.subr.bf16.mxu0 0
        %618 = vmatpush1.bf16.xpose.msra.mxu0 0
        %619 = vmatprep.subr.bf16.mxu0 0
        %620 = vmatpush1.bf16.xpose.msra.mxu0 0
        %621 = vmatprep.subr.bf16.mxu0 0
        %622 = vmatpush1.bf16.xpose.msra.mxu0 0
        %623 = vmatprep.subr.bf16.mxu0 0
        %624 = vmatpush1.bf16.xpose.msra.mxu0 0
        %625 = vmatprep.subr.bf16.mxu0 0
        %626 = vmatpush1.bf16.xpose.msra.mxu0 0
        %627 = vmatprep.subr.bf16.mxu0 0
        %628 = vmatpush1.bf16.xpose.msra.mxu0 0
        %629 = vmatprep.subr.bf16.mxu0 0
        %630 = vmatpush1.bf16.xpose.msra.mxu0 0
        %631 = vmatprep.subr.bf16.mxu0 0
        %632 = vmatpush1.bf16.xpose.msra.mxu0 0
        %633 = vmatprep.subr.bf16.mxu0 0
        %634 = vmatpush1.bf16.xpose.msra.mxu0 0
        %635 = vmatprep.subr.bf16.mxu0 0
        %636 = vmatpush1.bf16.xpose.msra.mxu0 0
        %637 = vmatprep.subr.bf16.mxu0 0
        %638 = vmatpush1.bf16.xpose.msra.mxu0 0
        %639 = vmatprep.subr.bf16.mxu0 0
        %640 = vmatpush1.bf16.xpose.msra.mxu0 0
        %641 = vmatprep.subr.bf16.mxu0 0
        %642 = vmatpush1.bf16.xpose.msra.mxu0 0
        %643 = vmatprep.subr.bf16.mxu0 0
        %644 = vmatpush1.bf16.xpose.msra.mxu0 0
        %645 = vmatprep.mubr.bf16.mxu0 0
        %646 = vmatmul.mubr.bf16.gmra.mrb[0].mxu0 %v611
        %v647 = vpop.f32.mrb[0].mxu0
        %v648 = vadd.f32 %v553, %v647
        %v649 = vpop.f32.mrb[0].mxu0
        %v650 = vpop.f32.mrb[0].mxu0
        %v651 = vpop.f32.mrb[0].mxu0
        %652 = vdwg.mxu0
        %654 = vrot.lane.b32.xlu0 %v559, 96
        %v655 = vpop.permute.xlu0 %654
        %v657 = vsel %vm563, %v556, 0
        %v660 = vsel %vm563, %v655, 0
        %662 = vmatprep.subr.bf16.mxu0 0
        %663 = vmatpush1.bf16.xpose.msra.mxu0 %v660
        %664 = vmatprep.subr.bf16.mxu0 0
        %665 = vmatpush1.bf16.xpose.msra.mxu0 0
        %666 = vmatprep.subr.bf16.mxu0 0
        %667 = vmatpush1.bf16.xpose.msra.mxu0 0
        %668 = vmatprep.subr.bf16.mxu0 0
        %669 = vmatpush1.bf16.xpose.msra.mxu0 0
        %670 = vmatprep.subr.bf16.mxu0 0
        %671 = vmatpush1.bf16.xpose.msra.mxu0 0
        %672 = vmatprep.subr.bf16.mxu0 0
        %673 = vmatpush1.bf16.xpose.msra.mxu0 0
        %674 = vmatprep.subr.bf16.mxu0 0
        %675 = vmatpush1.bf16.xpose.msra.mxu0 0
        %676 = vmatprep.subr.bf16.mxu0 0
        %677 = vmatpush1.bf16.xpose.msra.mxu0 0
        %678 = vmatprep.subr.bf16.mxu0 0
        %679 = vmatpush1.bf16.xpose.msra.mxu0 0
        %680 = vmatprep.subr.bf16.mxu0 0
        %681 = vmatpush1.bf16.xpose.msra.mxu0 0
        %682 = vmatprep.subr.bf16.mxu0 0
        %683 = vmatpush1.bf16.xpose.msra.mxu0 0
        %684 = vmatprep.subr.bf16.mxu0 0
        %685 = vmatpush1.bf16.xpose.msra.mxu0 0
        %686 = vmatprep.subr.bf16.mxu0 0
        %687 = vmatpush1.bf16.xpose.msra.mxu0 0
        %688 = vmatprep.subr.bf16.mxu0 0
        %689 = vmatpush1.bf16.xpose.msra.mxu0 0
        %690 = vmatprep.subr.bf16.mxu0 0
        %691 = vmatpush1.bf16.xpose.msra.mxu0 0
        %692 = vmatprep.subr.bf16.mxu0 0
        %693 = vmatpush1.bf16.xpose.msra.mxu0 0
        %694 = vmatprep.mubr.bf16.mxu0 0
        %695 = vmatmul.mubr.bf16.gmra.mrb[0].mxu0 %v657
        %v696 = vpop.f32.mrb[0].mxu0
        %v697 = vadd.f32 %v553, %v696
        %v698 = vpop.f32.mrb[0].mxu0
        %v699 = vpop.f32.mrb[0].mxu0
        %v700 = vpop.f32.mrb[0].mxu0
        %701 = vdwg.mxu0
        %v703 = vsel %vm563, %v557, 0
        %705 = vmatprep.subr.bf16.mxu0 0
        %706 = vmatpush1.bf16.xpose.msra.mxu0 %v660
        %707 = vmatprep.subr.bf16.mxu0 0
        %708 = vmatpush1.bf16.xpose.msra.mxu0 0
        %709 = vmatprep.subr.bf16.mxu0 0
        %710 = vmatpush1.bf16.xpose.msra.mxu0 0
        %711 = vmatprep.subr.bf16.mxu0 0
        %712 = vmatpush1.bf16.xpose.msra.mxu0 0
        %713 = vmatprep.subr.bf16.mxu0 0
        %714 = vmatpush1.bf16.xpose.msra.mxu0 0
        %715 = vmatprep.subr.bf16.mxu0 0
        %716 = vmatpush1.bf16.xpose.msra.mxu0 0
        %717 = vmatprep.subr.bf16.mxu0 0
        %718 = vmatpush1.bf16.xpose.msra.mxu0 0
        %719 = vmatprep.subr.bf16.mxu0 0
        %720 = vmatpush1.bf16.xpose.msra.mxu0 0
        %721 = vmatprep.subr.bf16.mxu0 0
        %722 = vmatpush1.bf16.xpose.msra.mxu0 0
        %723 = vmatprep.subr.bf16.mxu0 0
        %724 = vmatpush1.bf16.xpose.msra.mxu0 0
        %725 = vmatprep.subr.bf16.mxu0 0
        %726 = vmatpush1.bf16.xpose.msra.mxu0 0
        %727 = vmatprep.subr.bf16.mxu0 0
        %728 = vmatpush1.bf16.xpose.msra.mxu0 0
        %729 = vmatprep.subr.bf16.mxu0 0
        %730 = vmatpush1.bf16.xpose.msra.mxu0 0
        %731 = vmatprep.subr.bf16.mxu0 0
        %732 = vmatpush1.bf16.xpose.msra.mxu0 0
        %733 = vmatprep.subr.bf16.mxu0 0
        %734 = vmatpush1.bf16.xpose.msra.mxu0 0
        %735 = vmatprep.subr.bf16.mxu0 0
        %736 = vmatpush1.bf16.xpose.msra.mxu0 0
        %737 = vmatprep.mubr.bf16.mxu0 0
        %738 = vmatmul.mubr.bf16.gmra.mrb[0].mxu0 %v703
        %v739 = vpop.f32.mrb[0].mxu0
        %v740 = vadd.f32 %v553, %v739
        %v741 = vpop.f32.mrb[0].mxu0
        %v742 = vpop.f32.mrb[0].mxu0
        %v743 = vpop.f32.mrb[0].mxu0
        %744 = vdwg.mxu0
        %v745 = vsel %vm563, %v605, -inf
        %746 = vmax.xlane.f32.xlu0 %v745
        %v747 = vpop.xlane.xlu0 %746
        %v748 = vsel %vm563, %v648, -inf
        %749 = vmax.xlane.f32.xlu0 %v748
        %v750 = vpop.xlane.xlu0 %749
        %v751 = vsel %vm563, %v697, -inf
        %752 = vmax.xlane.f32.xlu0 %v751
        %v753 = vpop.xlane.xlu0 %752
        %v754 = vsel %vm563, %v740, -inf
        %755 = vmax.xlane.f32.xlu0 %v754
        %v756 = vpop.xlane.xlu0 %755
        %v757 = vsub.f32 %v605, %v747
        %v758 = vsub.f32 %v648, %v750
        %v759 = vsub.f32 %v697, %v753
        %v760 = vsub.f32 %v740, %v756
        %v761 = vmul.f32 %v757, 1.442695
        %v762 = vpow.pop %v761
        %v763 = vmul.f32 %v758, 1.442695
        %v764 = vpow.pop %v763
        %v765 = vmul.f32 %v759, 1.442695
        %v766 = vpow.pop %v765
        %v767 = vmul.f32 %v760, 1.442695
        %v768 = vpow.pop %v767
        %v769 = vsel %vm563, %v762, 0.0
        %770 = vadd.xlane.f32.xlu0 %v769
        %v771 = vpop.xlane.xlu0 %770
        %v772 = vsel %vm563, %v764, 0.0
        %773 = vadd.xlane.f32.xlu0 %v772
        %v774 = vpop.xlane.xlu0 %773
        %v775 = vsel %vm563, %v766, 0.0
        %776 = vadd.xlane.f32.xlu0 %v775
        %v777 = vpop.xlane.xlu0 %776
        %v778 = vsel %vm563, %v768, 0.0
        %779 = vadd.xlane.f32.xlu0 %v778
        %v780 = vpop.xlane.xlu0 %779
        %v781 = vrcp.pop %v771
        %v782 = vmul.f32 %v762, %v781
        %v783 = vrcp.pop %v774
        %v784 = vmul.f32 %v764, %v783
        %v785 = vrcp.pop %v777
        %v786 = vmul.f32 %v766, %v785
        %v787 = vrcp.pop %v780
        %v788 = vmul.f32 %v768, %v787
        %789 = vst.msk [vmem:[%s377] sm:$0xff] %vm563, %v782
        %790 = vst.msk [vmem:[%s377 + $0x8] sm:$0xff] %vm563, %v784
        %791 = vst.msk [vmem:[%s377 + $0x10] sm:$0xff] %vm563, %v786
        %792 = vst.msk [vmem:[%s377 + $0x18] sm:$0xff] %vm563, %v788
        %v793 = vpack.c.bf16 %v782, %v782
        %v794 = vpack.c.bf16 %v784, %v784
        %v795 = vpack.c.bf16 %v786, %v786
        %v796 = vpack.c.bf16 %v788, %v788
        %v797 = vpack.c.bf16 %v446, %v446
        %v798 = vpack.c.bf16 %v453, %v453
        %800 = vrot.lane.b32.xlu0 %v797, 80
        %v801 = vpop.permute.xlu0 %800
        %v803 = vsel %vm563, %v793, 0
        %vm805 = vcmask 1043456
        %v807 = vsel %vm805, %v801, 0
        %809 = vmatprep.subr.bf16.mxu0 0
        %810 = vmatpush1.bf16.msra.mxu0 %v807
        %811 = vmatprep.subr.bf16.mxu0 0
        %812 = vmatpush1.bf16.msra.mxu0 0
        %813 = vmatprep.subr.bf16.mxu0 0
        %814 = vmatpush1.bf16.msra.mxu0 0
        %815 = vmatprep.subr.bf16.mxu0 0
        %816 = vmatpush1.bf16.msra.mxu0 0
        %817 = vmatprep.subr.bf16.mxu0 0
        %818 = vmatpush1.bf16.msra.mxu0 0
        %819 = vmatprep.subr.bf16.mxu0 0
        %820 = vmatpush1.bf16.msra.mxu0 0
        %821 = vmatprep.subr.bf16.mxu0 0
        %822 = vmatpush1.bf16.msra.mxu0 0
        %823 = vmatprep.subr.bf16.mxu0 0
        %824 = vmatpush1.bf16.msra.mxu0 0
        %825 = vmatprep.subr.bf16.mxu0 0
        %826 = vmatpush1.bf16.msra.mxu0 0
        %827 = vmatprep.subr.bf16.mxu0 0
        %828 = vmatpush1.bf16.msra.mxu0 0
        %829 = vmatprep.subr.bf16.mxu0 0
        %830 = vmatpush1.bf16.msra.mxu0 0
        %831 = vmatprep.subr.bf16.mxu0 0
        %832 = vmatpush1.bf16.msra.mxu0 0
        %833 = vmatprep.subr.bf16.mxu0 0
        %834 = vmatpush1.bf16.msra.mxu0 0
        %835 = vmatprep.subr.bf16.mxu0 0
        %836 = vmatpush1.bf16.msra.mxu0 0
        %837 = vmatprep.subr.bf16.mxu0 0
        %838 = vmatpush1.bf16.msra.mxu0 0
        %839 = vmatprep.subr.bf16.mxu0 0
        %840 = vmatpush1.bf16.msra.mxu0 0
        %841 = vmatprep.mubr.bf16.mxu0 0
        %842 = vmatmul.mubr.bf16.gmra.mrb[0].mxu0 %v803
        %v843 = vpop.f32.mrb[0].mxu0
        %v844 = vadd.f32 0.0, %v843
        %v845 = vpop.f32.mrb[0].mxu0
        %v846 = vpop.f32.mrb[0].mxu0
        %v847 = vpop.f32.mrb[0].mxu0
        %848 = vdwg.mxu0
        %v850 = vsel %vm563, %v794, 0
        %852 = vmatprep.subr.bf16.mxu0 0
        %853 = vmatpush1.bf16.msra.mxu0 %v807
        %854 = vmatprep.subr.bf16.mxu0 0
        %855 = vmatpush1.bf16.msra.mxu0 0
        %856 = vmatprep.subr.bf16.mxu0 0
        %857 = vmatpush1.bf16.msra.mxu0 0
        %858 = vmatprep.subr.bf16.mxu0 0
        %859 = vmatpush1.bf16.msra.mxu0 0
        %860 = vmatprep.subr.bf16.mxu0 0
        %861 = vmatpush1.bf16.msra.mxu0 0
        %862 = vmatprep.subr.bf16.mxu0 0
        %863 = vmatpush1.bf16.msra.mxu0 0
        %864 = vmatprep.subr.bf16.mxu0 0
        %865 = vmatpush1.bf16.msra.mxu0 0
        %866 = vmatprep.subr.bf16.mxu0 0
        %867 = vmatpush1.bf16.msra.mxu0 0
        %868 = vmatprep.subr.bf16.mxu0 0
        %869 = vmatpush1.bf16.msra.mxu0 0
        %870 = vmatprep.subr.bf16.mxu0 0
        %871 = vmatpush1.bf16.msra.mxu0 0
        %872 = vmatprep.subr.bf16.mxu0 0
        %873 = vmatpush1.bf16.msra.mxu0 0
        %874 = vmatprep.subr.bf16.mxu0 0
        %875 = vmatpush1.bf16.msra.mxu0 0
        %876 = vmatprep.subr.bf16.mxu0 0
        %877 = vmatpush1.bf16.msra.mxu0 0
        %878 = vmatprep.subr.bf16.mxu0 0
        %879 = vmatpush1.bf16.msra.mxu0 0
        %880 = vmatprep.subr.bf16.mxu0 0
        %881 = vmatpush1.bf16.msra.mxu0 0
        %882 = vmatprep.subr.bf16.mxu0 0
        %883 = vmatpush1.bf16.msra.mxu0 0
        %884 = vmatprep.mubr.bf16.mxu0 0
        %885 = vmatmul.mubr.bf16.gmra.mrb[0].mxu0 %v850
        %v886 = vpop.f32.mrb[0].mxu0
        %v887 = vadd.f32 0.0, %v886
        %v888 = vpop.f32.mrb[0].mxu0
        %v889 = vpop.f32.mrb[0].mxu0
        %v890 = vpop.f32.mrb[0].mxu0
        %891 = vdwg.mxu0
        %893 = vrot.lane.b32.xlu0 %v798, 80
        %v894 = vpop.permute.xlu0 %893
        %v896 = vsel %vm563, %v795, 0
        %v899 = vsel %vm805, %v894, 0
        %901 = vmatprep.subr.bf16.mxu0 0
        %902 = vmatpush1.bf16.msra.mxu0 %v899
        %903 = vmatprep.subr.bf16.mxu0 0
        %904 = vmatpush1.bf16.msra.mxu0 0
        %905 = vmatprep.subr.bf16.mxu0 0
        %906 = vmatpush1.bf16.msra.mxu0 0
        %907 = vmatprep.subr.bf16.mxu0 0
        %908 = vmatpush1.bf16.msra.mxu0 0
        %909 = vmatprep.subr.bf16.mxu0 0
        %910 = vmatpush1.bf16.msra.mxu0 0
        %911 = vmatprep.subr.bf16.mxu0 0
        %912 = vmatpush1.bf16.msra.mxu0 0
        %913 = vmatprep.subr.bf16.mxu0 0
        %914 = vmatpush1.bf16.msra.mxu0 0
        %915 = vmatprep.subr.bf16.mxu0 0
        %916 = vmatpush1.bf16.msra.mxu0 0
        %917 = vmatprep.subr.bf16.mxu0 0
        %918 = vmatpush1.bf16.msra.mxu0 0
        %919 = vmatprep.subr.bf16.mxu0 0
        %920 = vmatpush1.bf16.msra.mxu0 0
        %921 = vmatprep.subr.bf16.mxu0 0
        %922 = vmatpush1.bf16.msra.mxu0 0
        %923 = vmatprep.subr.bf16.mxu0 0
        %924 = vmatpush1.bf16.msra.mxu0 0
        %925 = vmatprep.subr.bf16.mxu0 0
        %926 = vmatpush1.bf16.msra.mxu0 0
        %927 = vmatprep.subr.bf16.mxu0 0
        %928 = vmatpush1.bf16.msra.mxu0 0
        %929 = vmatprep.subr.bf16.mxu0 0
        %930 = vmatpush1.bf16.msra.mxu0 0
        %931 = vmatprep.subr.bf16.mxu0 0
        %932 = vmatpush1.bf16.msra.mxu0 0
        %933 = vmatprep.mubr.bf16.mxu0 0
        %934 = vmatmul.mubr.bf16.gmra.mrb[0].mxu0 %v896
        %v935 = vpop.f32.mrb[0].mxu0
        %v936 = vadd.f32 0.0, %v935
        %v937 = vpop.f32.mrb[0].mxu0
        %v938 = vpop.f32.mrb[0].mxu0
        %v939 = vpop.f32.mrb[0].mxu0
        %940 = vdwg.mxu0
        %v942 = vsel %vm563, %v796, 0
        %944 = vmatprep.subr.bf16.mxu0 0
        %945 = vmatpush1.bf16.msra.mxu0 %v899
        %946 = vmatprep.subr.bf16.mxu0 0
        %947 = vmatpush1.bf16.msra.mxu0 0
        %948 = vmatprep.subr.bf16.mxu0 0
        %949 = vmatpush1.bf16.msra.mxu0 0
        %950 = vmatprep.subr.bf16.mxu0 0
        %951 = vmatpush1.bf16.msra.mxu0 0
        %952 = vmatprep.subr.bf16.mxu0 0
        %953 = vmatpush1.bf16.msra.mxu0 0
        %954 = vmatprep.subr.bf16.mxu0 0
        %955 = vmatpush1.bf16.msra.mxu0 0
        %956 = vmatprep.subr.bf16.mxu0 0
        %957 = vmatpush1.bf16.msra.mxu0 0
        %958 = vmatprep.subr.bf16.mxu0 0
        %959 = vmatpush1.bf16.msra.mxu0 0
        %960 = vmatprep.subr.bf16.mxu0 0
        %961 = vmatpush1.bf16.msra.mxu0 0
        %962 = vmatprep.subr.bf16.mxu0 0
        %963 = vmatpush1.bf16.msra.mxu0 0
        %964 = vmatprep.subr.bf16.mxu0 0
        %965 = vmatpush1.bf16.msra.mxu0 0
        %966 = vmatprep.subr.bf16.mxu0 0
        %967 = vmatpush1.bf16.msra.mxu0 0
        %968 = vmatprep.subr.bf16.mxu0 0
        %969 = vmatpush1.bf16.msra.mxu0 0
        %970 = vmatprep.subr.bf16.mxu0 0
        %971 = vmatpush1.bf16.msra.mxu0 0
        %972 = vmatprep.subr.bf16.mxu0 0
        %973 = vmatpush1.bf16.msra.mxu0 0
        %974 = vmatprep.subr.bf16.mxu0 0
        %975 = vmatpush1.bf16.msra.mxu0 0
        %976 = vmatprep.mubr.bf16.mxu0 0
        %977 = vmatmul.mubr.bf16.gmra.mrb[0].mxu0 %v942
        %v978 = vpop.f32.mrb[0].mxu0
        %v979 = vadd.f32 0.0, %v978
        %v980 = vpop.f32.mrb[0].mxu0
        %v981 = vpop.f32.mrb[0].mxu0
        %v982 = vpop.f32.mrb[0].mxu0
        %983 = vdwg.mxu0
        %984 = vst.msk [vmem:[#allocation2] sm:$0xff] %vm563, %v844
        %986 = vrot.lane.b32.xlu0 %v887, 8
        %v987 = vpop.permute.xlu0 %986
        %vm989 = vcmask 130112
        %990 = vst.msk [vmem:[#allocation2] sm:$0xff] %vm989, %v987
        %992 = vrot.lane.b32.xlu0 %v936, 16
        %v993 = vpop.permute.xlu0 %992
        %vm995 = vcmask 195712
        %996 = vst.msk [vmem:[#allocation2] sm:$0xff] %vm995, %v993
        %998 = vrot.lane.b32.xlu0 %v979, 24
        %v999 = vpop.permute.xlu0 %998
        %vm1001 = vcmask 261312
        %1002 = vst.msk [vmem:[#allocation2] sm:$0xff] %vm1001, %v999
        %v1003 = vld [vmem:[#allocation2] sm:$0xff]
        %v1004 = vpack.c.bf16 %v1003, %v1003
        %v1005 = vld [vmem:[#allocation8] sm:$0xf]
        %v1006 = vld [vmem:[#allocation8 + $0x4] sm:$0xf]
        %v1007 = vld [vmem:[#allocation8 + $0x8] sm:$0xf]
        %v1008 = vld [vmem:[#allocation8 + $0xc] sm:$0xf]
        %v1013 = vunpack.c.l.b16 %v1005
        %v1014 = vunpack.c.l.b16 %v1006
        %v1015 = vunpack.c.l.b16 %v1007
        %v1016 = vunpack.c.l.b16 %v1008
        %v1017 = vpack.c.b16 %v1014, %v1013
        %v1018 = vpack.c.b16 %v1016, %v1015
        %vm1021 = vcmask 261120
        %v1023 = vsel %vm1021, %v1004, 0
        %1025 = vmatprep.subr.bf16.mxu0 0
        %1026 = vmatpush1.bf16.msra.mxu0 %v1017
        %1027 = vmatprep.subr.bf16.mxu0 0
        %1028 = vmatpush1.bf16.msra.mxu0 %v1018
        %1029 = vmatprep.subr.bf16.mxu0 0
        %1030 = vmatpush1.bf16.msra.mxu0 0
        %1031 = vmatprep.subr.bf16.mxu0 0
        %1032 = vmatpush1.bf16.msra.mxu0 0
        %1033 = vmatprep.subr.bf16.mxu0 0
        %1034 = vmatpush1.bf16.msra.mxu0 0
        %1035 = vmatprep.subr.bf16.mxu0 0
        %1036 = vmatpush1.bf16.msra.mxu0 0
        %1037 = vmatprep.subr.bf16.mxu0 0
        %1038 = vmatpush1.bf16.msra.mxu0 0
        %1039 = vmatprep.subr.bf16.mxu0 0
        %1040 = vmatpush1.bf16.msra.mxu0 0
        %1041 = vmatprep.subr.bf16.mxu0 0
        %1042 = vmatpush1.bf16.msra.mxu0 0
        %1043 = vmatprep.subr.bf16.mxu0 0
        %1044 = vmatpush1.bf16.msra.mxu0 0
        %1045 = vmatprep.subr.bf16.mxu0 0
        %1046 = vmatpush1.bf16.msra.mxu0 0
        %1047 = vmatprep.subr.bf16.mxu0 0
        %1048 = vmatpush1.bf16.msra.mxu0 0
        %1049 = vmatprep.subr.bf16.mxu0 0
        %1050 = vmatpush1.bf16.msra.mxu0 0
        %1051 = vmatprep.subr.bf16.mxu0 0
        %1052 = vmatpush1.bf16.msra.mxu0 0
        %1053 = vmatprep.subr.bf16.mxu0 0
        %1054 = vmatpush1.bf16.msra.mxu0 0
        %1055 = vmatprep.subr.bf16.mxu0 0
        %1056 = vmatpush1.bf16.msra.mxu0 0
        %1057 = vmatprep.mubr.bf16.mxu0 0
        %1058 = vmatmul.mubr.bf16.gmra.mrb[0].mxu0 %v1023
        %v1059 = vpop.f32.mrb[0].mxu0
        %v1060 = vadd.f32 0.0, %v1059
        %v1061 = vpop.f32.mrb[0].mxu0
        %v1062 = vpop.f32.mrb[0].mxu0
        %v1063 = vpop.f32.mrb[0].mxu0
        %1064 = vdwg.mxu0
        %1065 = vst.msk [vmem:[%s370] sm:$0xff] %vm1021, %v1060
        %s1066 = sand.u32 %s159, 1
        %s1067 = scalar_lea.sflag [#allocation5], %s1066
        %s1068 = sand.u32 %s159, 1
        %s1069 = smul.addr %s1068, 8
        %s1070 = scalar_lea.vmem [#allocation12], %s1069
        %s1071 = sand.u32 %s185, 1
        %s1072 = scalar_lea.sflag [#allocation14], %s1071
        %s1073 = sand.u32 %s185, 1
        %s1074 = smul.addr %s1073, 32
        %s1075 = scalar_lea.vmem [#allocation13], %s1074
        // Predicated region
        $region61: #{tpu_custom_call.1} parent=39 // pred_check
          %p1076 = pneg %p169
        $region62: #{tpu_custom_call.1} parent=39 // pred_check_branch
          %1078 = sbr.rel (%p1076) target = $region64
        $region63: #{tpu_custom_call.1} parent=39 // pred_region
          %s1080 = ssub.s32 128, 128
          %1081 = vsyncadd %s1067, %s1080
          %s1082 = smul.addr %s31, 128
          %s1083 = scalar_lea.hbm %s5, %s1082
          %s1085 = sshll.u32 %s1070, 4
          %s1086 = int_to_ptr.vmem [resolvable:$true] %s1085
          %1088 = dma.vmem_to_hbm [thread:$0]  %s1086, 128, %s1083, %s1067
        $region64: #{tpu_custom_call.1} parent=39 // pred_fallthru
          _
        // Predicated region
        $region65: #{tpu_custom_call.1} parent=39 // pred_check
          %p1089 = pneg %p195
        $region66: #{tpu_custom_call.1} parent=39 // pred_check_branch
          %1091 = sbr.rel (%p1089) target = $region68
        $region67: #{tpu_custom_call.1} parent=39 // pred_region
          %s1093 = ssub.s32 512, 512
          %1094 = vsyncadd %s1072, %s1093
          %s1095 = smul.addr %s31, 4
          %s1096 = smul.addr %s1095, 128
          %s1097 = scalar_lea.hbm %s6, %s1096
          %s1098 = sshll.u32 %s1075, 4
          %s1099 = int_to_ptr.vmem [resolvable:$true] %s1098
          %1104 = dma.vmem_to_hbm [thread:$0]  %s1099, 512, %s1097, %s1072, 128, 128, 8
        $region68: #{tpu_custom_call.1} parent=39 // pred_fallthru
          _
      $region40: #{tpu_custom_call.1} parent=5 // pred_fallthru
        _
      %p1105 = scmp.le.s32.totalorder 2, %s26
      // Predicated region
      $region69: #{tpu_custom_call.1} parent=5 // pred_check
        %p1106 = pneg %p1105
      $region70: #{tpu_custom_call.1} parent=5 // pred_check_branch
        %1108 = sbr.rel (%p1106) target = $region72
      $region71: #{tpu_custom_call.1} parent=5 // pred_region
        %s1109 = ssub.s32 %s26, 2
        // Predicated region
        $region73: #{tpu_custom_call.1} parent=71 // pred_check
          %p1110 = pneg %p175
        $region74: #{tpu_custom_call.1} parent=71 // pred_check_branch
          %1112 = sbr.rel (%p1110) target = $region76
        $region75: #{tpu_custom_call.1} parent=71 // pred_region
          %s1113 = sand.u32 %s160, 1
          %s1114 = scalar_lea.sflag [#allocation5], %s1113
          %s1115 = sand.u32 %s160, 1
          %s1116 = smul.addr %s1115, 8
          %s1117 = scalar_lea.vmem [#allocation12], %s1116
          %1118 = dma.done %s1114, 128
        $region76: #{tpu_custom_call.1} parent=71 // pred_fallthru
          _
        // Predicated region
        $region77: #{tpu_custom_call.1} parent=71 // pred_check
          %p1119 = pneg %p201
        $region78: #{tpu_custom_call.1} parent=71 // pred_check_branch
          %1121 = sbr.rel (%p1119) target = $region80
        $region79: #{tpu_custom_call.1} parent=71 // pred_region
          %s1122 = sand.u32 %s186, 1
          %s1123 = scalar_lea.sflag [#allocation14], %s1122
          %s1124 = sand.u32 %s186, 1
          %s1125 = smul.addr %s1124, 32
          %s1126 = scalar_lea.vmem [#allocation13], %s1125
          %1127 = dma.done %s1123, 512
        $region80: #{tpu_custom_call.1} parent=71 // pred_fallthru
          _
      $region72: #{tpu_custom_call.1} parent=5 // pred_fallthru
        _
    $region6: #{tpu_custom_call.1} parent=1 // loop_footer
      %s30 = sadd.s32 1, %s26
    $region7: #{tpu_custom_call.1} parent=1 // loop_footer_branch
      %25 = sbr.rel target = $region3
    $region8: #{tpu_custom_call.1} parent=1 // loop_exit
      _
    %1128 = vsyncpa [#allocation4], 1
    %s1129 = scalar_lea.sflag [#allocation4], 1
    %1130 = vsyncpa %s1129, 1
    %1131 = vsyncpa [#allocation7], 1
    %1132 = vsyncpa [#allocation10], 1
    %s1133 = scalar_lea.sflag [#allocation10], 1
    %1134 = vsyncpa %s1133, 1
    %1135 = vsyncpa [#allocation5], 1
    %s1136 = scalar_lea.sflag [#allocation5], 1
    %1137 = vsyncpa %s1136, 1
    %1138 = vsyncpa [#allocation14], 1
    %s1139 = scalar_lea.sflag [#allocation14], 1
    %1140 = vsyncpa %s1139, 1

</llo_original>
